<compile_context>
chip_gen: v7x
topology: tpu7x:2x2x1
jax: 0.10.0
libtpu: 0.0.40
codegen_flags: <defaults>
</compile_context>

<pallas_src>
import functools

import jax
import jax.numpy as jnp
from jax.experimental import pallas as pl
from jax.experimental.pallas import tpu as pltpu


FEATURE_INDEX = [2, 7, 16, 25, 34]


def _gap_softmax_fused_kernel(x_ref, o_ref, acc_ref, *, inv_hw):
    """x_ref: (1, n_tile, C, hw_tile); o_ref: (1, n_tile, C); acc_ref: (1, n_tile, C) f32."""
    k = pl.program_id(2)

    @pl.when(k == 0)
    def _init():
        acc_ref[...] = jnp.zeros_like(acc_ref)

    # Running spatial sum for this tile; accumulate in f32 without materializing a
    # full-precision copy of the whole block (matters for bf16 inputs / v7x VMEM).
    acc_ref[...] += jnp.sum(x_ref[...], axis=-1, dtype=jnp.float32)

    @pl.when(k == pl.num_programs(2) - 1)
    def _finalize():
        gap = acc_ref[...] * inv_hw                    # mean = running sum * 1/HW (once)
        m = jnp.max(gap, axis=-1, keepdims=True)       # numerically-stable softmax
        e = jnp.exp(gap - m)
        denom = jnp.sum(e, axis=-1, keepdims=True)
        r = pl.reciprocal(denom, approx=True)          # EUP slot
        r = r * (2.0 - denom * r)                      # one Newton step -> ~exact 1/denom
        o_ref[...] = (e * r).astype(o_ref.dtype)


def _pick_tile(dim, unit, cap):
    """Largest multiple of `unit` dividing `dim`, capped at `cap`; else full `dim`."""
    best = None
    t = unit
    while t <= min(dim, cap):
        if dim % t == 0:
            best = t
        t += unit
    # TODO(synk): if `dim` is large and has no multiple-of-`unit` divisor, a masked
    # ragged tile would be needed; for now fall back to the full axis as one block.
    return best if best is not None else dim


def _pick_n_tile(n, c, hw_tile, itemsize, budget_bytes):
    """Batch tile: multiple of 8 (out-spec (8,128) rule) or full N, fitting the VMEM budget."""

    def fits(nt):
        # double-buffered input block
        return 2 * nt * c * hw_tile * itemsize <= budget_bytes

    if fits(n):
        return n
    best = None
    t = 8
    while t <= n:
        if n % t == 0 and fits(t):
            best = t
        t += 8
    if best is not None:
        return best
    # TODO(synk): no aligned batch divisor fits the budget; fall back to the full batch.
    return n


def _cat_gap_group(x, *, max_hw_tile=2048, vmem_budget_bytes=16 * 1024 * 1024):
    """Fused GAP + softmax for a stack of identically-shaped NCHW features.

    x: (F, N, C, H, W)  ->  (F, N, C) softmax(mean over H*W, axis=C).
    """
    f, n, c, h, w = x.shape
    hw = h * w
    x_flat = x.reshape(f, n, c, hw)  # layout glue in plain JAX; lane axis = spatial

    hw_tile = _pick_tile(hw, 128, max_hw_tile)
    n_tile = _pick_n_tile(n, c, hw_tile, jnp.dtype(x.dtype).itemsize, vmem_budget_bytes)

    grid = (f, n // n_tile, hw // hw_tile)
    kernel = functools.partial(_gap_softmax_fused_kernel, inv_hw=float(1.0 / hw))

    return pl.pallas_call(
        kernel,
        out_shape=jax.ShapeDtypeStruct((f, n, c), x.dtype),
        grid_spec=pltpu.PrefetchScalarGridSpec(
            num_scalar_prefetch=0,
            grid=grid,
            in_specs=[
                pl.BlockSpec(
                    (1, n_tile, c, hw_tile),
                    lambda fi, ni, ki: (fi, ni, 0, ki),
                )
            ],
            out_specs=pl.BlockSpec(
                (1, n_tile, c),
                lambda fi, ni, ki: (fi, ni, 0),  # resident across reduction axis
            ),
            scratch_shapes=[pltpu.VMEM((1, n_tile, c), jnp.float32)],
        ),
        compiler_params=pltpu.CompilerParams(
            dimension_semantics=("parallel", "parallel", "arbitrary"),
            vmem_limit_bytes=32 * 1024 * 1024,
        ),
    )(x_flat)


def cat_gap_forward(input_list, feature_index=FEATURE_INDEX, *, max_hw_tile=2048):
    """Mirror of CatGAP.forward: returns a list of softmaxed GAP vectors, one per index.

    Identically-shaped feature maps share a single fused pallas_call launch.
    """
    feats = [input_list[i] for i in feature_index]

    groups = {}
    for pos, feat in enumerate(feats):
        key = (tuple(feat.shape), str(feat.dtype))
        groups.setdefault(key, []).append(pos)

    results = [None] * len(feats)
    for _, positions in groups.items():
        stacked = jnp.stack([feats[p] for p in positions], axis=0)  # (Fg, N, C, H, W)
        out = _cat_gap_group(stacked, max_hw_tile=max_hw_tile)      # (Fg, N, C)
        for j, p in enumerate(positions):
            results[p] = out[j]
    return results


def _reference_single(feat):
    gap = jnp.mean(feat.astype(jnp.float32), axis=(2, 3))
    return jax.nn.softmax(gap, axis=1).astype(feat.dtype)


if __name__ == "__main__":
    key = jax.random.PRNGKey(0)
    n, c, h, w = 2, 4, 16, 16

    # Indexable collection of NCHW tensors; only feature_index entries are consumed.
    num_feats = 35
    keys = jax.random.split(key, num_feats)
    input_list = [
        jax.random.normal(keys[i], (n, c, h, w), dtype=jnp.float32)
        for i in range(num_feats)
    ]

    # max_hw_tile=128 forces >1 reduction step so the accumulator path is exercised.
    outs = cat_gap_forward(input_list, max_hw_tile=128)
    outs = [jax.block_until_ready(o) for o in outs]

    for idx, o in zip(FEATURE_INDEX, outs):
        ref = _reference_single(input_list[idx])
        assert o.shape == (n, c), f"bad shape at index {idx}: {o.shape}"
        assert jnp.allclose(o, ref, atol=1e-5, rtol=1e-5), f"mismatch at index {idx}"

    print("KERNEL_OK")
</pallas_src>

<mosaic_0001>
module attributes {stable_mosaic.version = 11 : i64} {
  func.func @_gap_softmax_fused_kernel(%arg0: i32, %arg1: i32, %arg2: i32, %arg3: memref<1x2x4x128xf32, #tpu.memory_space<vmem>>, %arg4: memref<1x2x4xf32, #tpu.memory_space<vmem>>, %arg5: memref<1x2x4xf32, #tpu.memory_space<vmem>>) attributes {dimension_semantics = [#tpu.dimension_semantics<parallel>, #tpu.dimension_semantics<parallel>, #tpu.dimension_semantics<arbitrary>], iteration_bounds = array<i64: 5, 1, 2>, scalar_prefetch = 0 : i64, scratch_operands = 1 : i64, tpu.core_type = #tpu.core_type<tc>, window_params = [{transform_indices = @transform_0, window_bounds = array<i64: 1, 2, 4, 128>}, {transform_indices = @transform_1, window_bounds = array<i64: 1, 2, 4>}]} {
    %c0_i32 = arith.constant 0 : i32
    %0 = arith.cmpi eq, %arg2, %c0_i32 : i32
    %1 = arith.extui %0 : i1 to i32
    %c0_i32_0 = arith.constant 0 : i32
    %2 = arith.cmpi ne, %1, %c0_i32_0 : i32
    scf.if %2 {
      %cst_11 = arith.constant 0.000000e+00 : f32
      %11 = vector.broadcast %cst_11 : f32 to vector<1x2x4xf32>
      %c0_12 = arith.constant 0 : index
      %c0_13 = arith.constant 0 : index
      %c0_14 = arith.constant 0 : index
      %12 = vector.load %arg5[%c0_12, %c0_13, %c0_14] : memref<1x2x4xf32, #tpu.memory_space<vmem>>, vector<1x2x4xf32>
      tpu.vector_store %arg5[%c0_12, %c0_13, %c0_14], %11 {strides = array<i32>} : memref<1x2x4xf32, #tpu.memory_space<vmem>>, vector<1x2x4xf32>,
    } else {
    }
    %c0 = arith.constant 0 : index
    %c0_1 = arith.constant 0 : index
    %c0_2 = arith.constant 0 : index
    %3 = vector.load %arg5[%c0, %c0_1, %c0_2] : memref<1x2x4xf32, #tpu.memory_space<vmem>>, vector<1x2x4xf32>
    %c0_3 = arith.constant 0 : index
    %c0_4 = arith.constant 0 : index
    %c0_5 = arith.constant 0 : index
    %c0_6 = arith.constant 0 : index
    %4 = vector.load %arg3[%c0_3, %c0_4, %c0_5, %c0_6] : memref<1x2x4x128xf32, #tpu.memory_space<vmem>>, vector<1x2x4x128xf32>
    %cst = arith.constant dense<0.000000e+00> : vector<1x2x4xf32>
    %5 = vector.multi_reduction <add>, %4, %cst [3] : vector<1x2x4x128xf32> to vector<1x2x4xf32>
    %6 = arith.addf %3, %5 : vector<1x2x4xf32>
    %c0_7 = arith.constant 0 : index
    %c0_8 = arith.constant 0 : index
    %c0_9 = arith.constant 0 : index
    %7 = vector.load %arg5[%c0_7, %c0_8, %c0_9] : memref<1x2x4xf32, #tpu.memory_space<vmem>>, vector<1x2x4xf32>
    tpu.vector_store %arg5[%c0_7, %c0_8, %c0_9], %6 {strides = array<i32>} : memref<1x2x4xf32, #tpu.memory_space<vmem>>, vector<1x2x4xf32>,
    %c1_i32 = arith.constant 1 : i32
    %8 = arith.cmpi eq, %arg2, %c1_i32 : i32
    %9 = arith.extui %8 : i1 to i32
    %c0_i32_10 = arith.constant 0 : i32
    %10 = arith.cmpi ne, %9, %c0_i32_10 : i32
    scf.if %10 {
      %c0_11 = arith.constant 0 : index
      %c0_12 = arith.constant 0 : index
      %c0_13 = arith.constant 0 : index
      %11 = vector.load %arg5[%c0_11, %c0_12, %c0_13] : memref<1x2x4xf32, #tpu.memory_space<vmem>>, vector<1x2x4xf32>
      %cst_14 = arith.constant 3.906250e-03 : f32
      %12 = vector.broadcast %cst_14 : f32 to vector<1x2x4xf32>
      %13 = arith.mulf %11, %12 : vector<1x2x4xf32>
      %cst_15 = arith.constant dense<0xFF800000> : vector<1x2xf32>
      %14 = vector.multi_reduction <maximumf>, %13, %cst_15 [2] : vector<1x2x4xf32> to vector<1x2xf32>
      %15 = vector.shape_cast %14 : vector<1x2xf32> to vector<1x2x1xf32>
      %16 = vector.broadcast %15 : vector<1x2x1xf32> to vector<1x2x4xf32>
      %17 = arith.subf %13, %16 : vector<1x2x4xf32>
      %18 = math.exp %17 : vector<1x2x4xf32>
      %cst_16 = arith.constant dense<0.000000e+00> : vector<1x2xf32>
      %19 = vector.multi_reduction <add>, %18, %cst_16 [2] : vector<1x2x4xf32> to vector<1x2xf32>
      %20 = vector.shape_cast %19 : vector<1x2xf32> to vector<1x2x1xf32>
      %21 = tpu.reciprocal %20 {approx = true} : vector<1x2x1xf32> -> vector<1x2x1xf32>
      %22 = arith.mulf %20, %21 : vector<1x2x1xf32>
      %cst_17 = arith.constant 2.000000e+00 : f32
      %23 = vector.broadcast %cst_17 : f32 to vector<1x2x1xf32>
      %24 = arith.subf %23, %22 : vector<1x2x1xf32>
      %25 = arith.mulf %21, %24 : vector<1x2x1xf32>
      %26 = vector.broadcast %25 : vector<1x2x1xf32> to vector<1x2x4xf32>
      %27 = arith.mulf %18, %26 : vector<1x2x4xf32>
      %c0_18 = arith.constant 0 : index
      %c0_19 = arith.constant 0 : index
      %c0_20 = arith.constant 0 : index
      %28 = vector.load %arg4[%c0_18, %c0_19, %c0_20] : memref<1x2x4xf32, #tpu.memory_space<vmem>>, vector<1x2x4xf32>
      tpu.vector_store %arg4[%c0_18, %c0_19, %c0_20], %27 {strides = array<i32>} : memref<1x2x4xf32, #tpu.memory_space<vmem>>, vector<1x2x4xf32>,
    } else {
    }
    return
  }
  func.func @transform_0(%arg0: i32, %arg1: i32, %arg2: i32) -> (i32, i32, i32, i32) {
    %c0_i32 = arith.constant 0 : i32
    %c0_i32_0 = arith.constant 0 : i32
    return %arg0, %arg1, %c0_i32, %arg2 : i32, i32, i32, i32
  }
  func.func @transform_1(%arg0: i32, %arg1: i32, %arg2: i32) -> (i32, i32, i32) {
    %c0_i32 = arith.constant 0 : i32
    %c0_i32_0 = arith.constant 0 : i32
    return %arg0, %arg1, %c0_i32 : i32, i32, i32
  }
}

</mosaic_0001>

<llo_original>
// kernel: tpu_custom_call.1
$region0: #{tpu_custom_call.1}
  #allocation0 [shape = 'u32[]', space=smem, size = 0x4, offset = 0x4, fixed_abs, tag = 'smem constant byte address 0x4 - core index']
  #allocation1 [shape = 'u32[144,128]{1,0:T(1,128)}', space=vmem, size = 0x12000, scoped, tag = 'internal scratch']
  #allocation2 [shape = 'f32[1,2,4]{2,1,0:T(2,128)}', space=vmem, size = 0x400, scoped, tag = 'scratch operand']
  %s0 = inlined_call_operand.hbm [shape: f32[5,2,4,256], index: 0, kind: input, shape index: {}]
  %s1 = inlined_call_operand.vmem [shape: f32[5,2,4], index: 1, kind: output, shape index: {}]
  %s2 = sld [smem:[#allocation0]]
  $region49: #{tpu_custom_call.1} parent=0
    _
  %s4 = ssub.s32 1, %s2
  %s5 = scalar_select 0, %s4, %s2
  $region1: #{tpu_custom_call.1} parent=0
    #allocation3 [shape = 'u8[8192]{0}', space=vmem, size = 0x2000, scoped, tag = 'input window, operand 0']
    #allocation4 [shape = 's32[2]{0}', space=sflag, size = 0x8, scoped, tag = 'scoped memory for tpu_custom_call.1']
    %6 = vsyncpa [#allocation4], 0
    %s7 = scalar_lea.sflag [#allocation4], 1
    %8 = vsyncpa %s7, 0
    loop: start=0, step=1, limit=12
    $region2: #{tpu_custom_call.1} parent=1 // loop_pre_header
      _
    $region3: #{tpu_custom_call.1} parent=1 // loop_header
      %s10 = sphi 0, %s14
      %p11 = scmp.ge.s32.totalorder %s10, 12
      %s17 = sphi 0, %s36
      %s18 = sphi 0, %s32
      %s19 = sphi 0, %s28
      %s20 = sphi 0, %s17
      %s21 = sphi 0, %s18
      %s22 = sphi 0, %s19
      %s23 = sphi 0, %s20
      %s24 = sphi 0, %s21
      %s25 = sphi 0, %s22
      %s43 = sphi 0, %s45
      %s46 = sphi 0, %s43
      %s47 = sphi 0, %s46
      %s63 = sphi 0, %s47
      %s71 = sphi 0, %s73
      %s74 = sphi 0, %s71
      %s75 = sphi 0, %s74
      %s91 = sphi 0, %s75
    $region4: #{tpu_custom_call.1} parent=1 // loop_header_branch
      %13 = sbr.rel (%p11) target = $region8
    $region5: #{tpu_custom_call.1} parent=1 // loop_body
      %s15 = ssub.s32 %s10, 1
      %s16 = ssub.s32 %s10, 2
      %s26 = sadd.s32 1, %s19
      %p27 = scmp.ge.s32.totalorder %s26, 2
      %s28 = scalar_select %p27, 0, %s26
      %s29 = sadd.s32 1, %s18
      %s30 = scalar_select %p27, %s29, %s18
      %p31 = scmp.ge.s32.totalorder %s30, 1
      %s32 = scalar_select %p31, 0, %s30
      %s33 = sadd.s32 1, %s17
      %s34 = scalar_select %p31, %s33, %s17
      %p35 = scmp.ge.s32.totalorder %s34, 5
      %s36 = scalar_select %p35, 0, %s34
      %s37 = ssub.s32 %s17, %s36
      %s38 = ssub.s32 %s18, %s32
      %s39 = sor.u32 %s37, %s38
      %s40 = ssub.s32 %s19, %s28
      %s41 = sor.u32 %s39, %s40
      %p42 = scmp.eq.s32.totalorder %s41, 0
      %s44 = sadd.s32 %s43, 1
      %s45 = scalar_select %p42, %s43, %s44
      %p48 = pneg %p42
      %p49 = scmp.eq.s32.totalorder %s10, 9
      %p50 = por %p48, %p49
      %p51 = scmp.ne.s32.totalorder %s43, %s46
      %p52 = scmp.eq.s32.totalorder %s10, 0
      %p53 = por %p51, %p52
      %p54 = scmp.ne.s32.totalorder %s43, %s46
      %p55 = scmp.eq.s32.totalorder %s15, 9
      %p56 = por %p54, %p55
      %p57 = scmp.ne.s32.totalorder %s46, %s47
      %p58 = scmp.eq.s32.totalorder %s15, 0
      %p59 = por %p57, %p58
      %p60 = scmp.ne.s32.totalorder %s46, %s47
      %p61 = scmp.eq.s32.totalorder %s16, 9
      %p62 = por %p60, %p61
      %p64 = scmp.ne.s32.totalorder %s47, %s63
      %p65 = scmp.eq.s32.totalorder %s16, 0
      %p66 = por %p64, %p65
      %s67 = ssub.s32 %s17, %s36
      %s68 = ssub.s32 %s18, %s32
      %s69 = sor.u32 %s67, %s68
      %p70 = scmp.eq.s32.totalorder %s69, 0
      %s72 = sadd.s32 %s71, 1
      %s73 = scalar_select %p70, %s71, %s72
      %p76 = pneg %p70
      %p77 = scmp.eq.s32.totalorder %s10, 9
      %p78 = por %p76, %p77
      %p79 = scmp.ne.s32.totalorder %s71, %s74
      %p80 = scmp.eq.s32.totalorder %s10, 0
      %p81 = por %p79, %p80
      %p82 = scmp.ne.s32.totalorder %s71, %s74
      %p83 = scmp.eq.s32.totalorder %s15, 9
      %p84 = por %p82, %p83
      %p85 = scmp.ne.s32.totalorder %s74, %s75
      %p86 = scmp.eq.s32.totalorder %s15, 0
      %p87 = por %p85, %p86
      %p88 = scmp.ne.s32.totalorder %s74, %s75
      %p89 = scmp.eq.s32.totalorder %s16, 9
      %p90 = por %p88, %p89
      %p92 = scmp.ne.s32.totalorder %s75, %s91
      %p93 = scmp.eq.s32.totalorder %s16, 0
      %p94 = por %p92, %p93
      %p95 = scmp.le.s32.totalorder 1, %s10
      %p96 = scmp.lt.s32.totalorder %s10, 11
      %p97 = pnand %p95, %p96
      %p98 = pneg %p97
      // Predicated region
      $region9: #{tpu_custom_call.1} parent=5 // pred_check
        _
      $region10: #{tpu_custom_call.1} parent=5 // pred_check_branch
        %100 = sbr.rel (%p97) target = $region12
      $region11: #{tpu_custom_call.1} parent=5 // pred_region
        %s101 = ssub.s32 %s10, 1
      $region12: #{tpu_custom_call.1} parent=5 // pred_fallthru
        _
      %p102 = scmp.lt.s32.totalorder %s10, 10
      // Predicated region
      $region13: #{tpu_custom_call.1} parent=5 // pred_check
        %p103 = pneg %p102
      $region14: #{tpu_custom_call.1} parent=5 // pred_check_branch
        %105 = sbr.rel (%p103) target = $region16
      $region15: #{tpu_custom_call.1} parent=5 // pred_region
        // Predicated region
        $region17: #{tpu_custom_call.1} parent=15 // pred_check
          %p106 = pneg %p53
        $region18: #{tpu_custom_call.1} parent=15 // pred_check_branch
          %108 = sbr.rel (%p106) target = $region20
        $region19: #{tpu_custom_call.1} parent=15 // pred_region
          %s109 = sand.u32 %s43, 1
          %s110 = scalar_lea.sflag [#allocation4], %s109
          %s111 = sand.u32 %s43, 1
          %s112 = smul.addr %s111, 8
          %s113 = scalar_lea.vmem [#allocation3], %s112
          %s114 = smul.u32 2, %s18
          %s116 = ssub.s32 128, 128
          %117 = vsyncadd %s110, %s116
          %s118 = smul.addr %s114, 2
          %s119 = sadd.s32 %s19, %s118
          %s120 = smul.addr %s17, 4
          %s121 = sadd.s32 %s119, %s120
          %s122 = smul.addr %s121, 64
          %s123 = scalar_lea.hbm %s0, %s122
          %s124 = sshll.u32 %s113, 4
          %s125 = int_to_ptr.vmem [resolvable:$true] %s124
          %130 = dma.hbm_to_vmem [thread:$0]  %s123, 128, %s125, %s110, 128, 64, 4
        $region20: #{tpu_custom_call.1} parent=15 // pred_fallthru
          _
      $region16: #{tpu_custom_call.1} parent=5 // pred_fallthru
        _
      %p131 = scmp.le.s32.totalorder 1, %s10
      %p132 = scmp.lt.s32.totalorder %s10, 11
      %p133 = pnand %p131, %p132
      %p134 = pneg %p133
      // Predicated region
      $region21: #{tpu_custom_call.1} parent=5 // pred_check
        _
      $region22: #{tpu_custom_call.1} parent=5 // pred_check_branch
        %136 = sbr.rel (%p133) target = $region24
      $region23: #{tpu_custom_call.1} parent=5 // pred_region
        %s137 = ssub.s32 %s10, 1
        %s138 = sand.u32 %s46, 1
        %s139 = scalar_lea.sflag [#allocation4], %s138
        %s140 = sand.u32 %s46, 1
        %s141 = smul.addr %s140, 8
        %s142 = scalar_lea.vmem [#allocation3], %s141
        // Predicated region
        $region25: #{tpu_custom_call.1} parent=23 // pred_check
          %p143 = pneg %p59
        $region26: #{tpu_custom_call.1} parent=23 // pred_check_branch
          %145 = sbr.rel (%p143) target = $region28
        $region27: #{tpu_custom_call.1} parent=23 // pred_region
          %146 = dma.done %s139, 128
        $region28: #{tpu_custom_call.1} parent=23 // pred_fallthru
          _
        %s147 = sand.u32 %s46, 1
        %s148 = scalar_lea.sflag [#allocation4], %s147
        %s149 = sand.u32 %s46, 1
        %s150 = smul.addr %s149, 8
        %s151 = scalar_lea.vmem [#allocation3], %s150
        %p152 = pneg %p59
        %p153 = pneg %p56
        %p154 = pneg %p87
        %p155 = pneg %p84
        %p156 = scmp.lt.s32.totalorder %s20, 4
        %s157 = scalar_select %p156, %s20, 4
        %p158 = scmp.lt.s32.totalorder %s21, 0
        %s159 = scalar_select %p158, %s21, 0
        %s160 = sadd.s32 %s159, %s157
        %s161 = smul.addr %s160, 2
        %s162 = scalar_lea.vmem %s1, %s161
        %s163 = smul.u32 2, %s21
        %p164 = scmp.lt.s32.totalorder %s20, 4
        %s165 = scalar_select %p164, %s20, 4
        %p166 = scmp.lt.s32.totalorder %s21, 0
        %s167 = scalar_select %p166, %s21, 0
        %s168 = sadd.s32 %s167, %s165
        %s169 = smul.addr %s168, 2
        %s170 = scalar_lea.vmem %s1, %s169
        %p171 = scmp.eq.s32.totalorder %s22, 0
        // Predicated region
        $region29: #{tpu_custom_call.1} parent=23 // pred_check
          %p172 = pneg %p171
        $region30: #{tpu_custom_call.1} parent=23 // pred_check_branch
          %174 = sbr.rel (%p172) target = $region32
        $region31: #{tpu_custom_call.1} parent=23 // pred_region
          %vm175 = vcmask 25600
          %176 = vst.msk [vmem:[#allocation2] sm:$0x3] %vm175, 0.0
        $region32: #{tpu_custom_call.1} parent=23 // pred_fallthru
          _
        %v177 = vld [vmem:[#allocation2] sm:$0x3]
        %v178 = vld [vmem:[%s142] sm:$0xf]
        %v179 = vld [vmem:[%s142 + $0x4] sm:$0xf]
        %vm180 = vcmask 1043456
        %v181 = vsel %vm180, %v178, 0.0
        %182 = vadd.xlane.f32.xlu0 %v181
        %v183 = vpop.xlane.xlu0 %182
        %v184 = vsel %vm180, %v179, 0.0
        %185 = vadd.xlane.f32.xlu0 %v184
        %v186 = vpop.xlane.xlu0 %185
        %v189 = vlaneseq
        %v190 = vand.u32 %v189, 127
        %v191 = vlaneseq
        %v192 = vshrl.u32 %v191, 7
        %v193 = vsub.s32 %v190, %v192
        %v194 = vrot.slane %v183, %v193
        %v195 = vlaneseq
        %v196 = vshrl.u32 %v195, 7
        %v197 = vsub.s32 %v190, %v196
        %v198 = vrot.slane %v186, %v197
        %vm199 = vcmask 1041409
        %v200 = vsel %vm199, %v198, %v194
        %v202 = vadd.f32 %v177, %v200
        %vm203 = vcmask 25600
        %204 = vst.msk [vmem:[#allocation2] sm:$0x3] %vm203, %v202
        %p205 = scmp.eq.s32.totalorder %s22, 1
        // Predicated region
        $region33: #{tpu_custom_call.1} parent=23 // pred_check
          %p206 = pneg %p205
        $region34: #{tpu_custom_call.1} parent=23 // pred_check_branch
          %208 = sbr.rel (%p206) target = $region36
        $region35: #{tpu_custom_call.1} parent=23 // pred_region
          %v209 = vld [vmem:[#allocation2] sm:$0x3]
          %v210 = vmul.f32 %v209, 0.00390625
          %v211 = vsel %vm203, %v210, -inf
          %212 = vmax.xlane.f32.xlu0 %v211
          %v213 = vpop.xlane.xlu0 %212
          %v214 = vsub.f32 %v210, %v213
          %v215 = vmul.f32 %v214, 1.442695
          %v216 = vpow.pop %v215
          %v217 = vsel %vm203, %v216, 0.0
          %218 = vadd.xlane.f32.xlu0 %v217
          %v219 = vpop.xlane.xlu0 %218
          %v220 = vrcp.pop %v219
          %v221 = vmul.f32 %v219, %v220
          %v222 = vsub.f32 2.0, %v221
          %v223 = vmul.f32 %v220, %v222
          %v224 = vmul.f32 %v216, %v223
          %225 = vst.msk [vmem:[%s170] sm:$0x3] %vm203, %v224
        $region36: #{tpu_custom_call.1} parent=23 // pred_fallthru
          _
        %p226 = scmp.lt.s32.totalorder %s20, 4
        %s227 = scalar_select %p226, %s20, 4
        %p228 = scmp.lt.s32.totalorder %s21, 0
        %s229 = scalar_select %p228, %s21, 0
        %s230 = sadd.s32 %s229, %s227
        %s231 = smul.addr %s230, 2
        %s232 = scalar_lea.vmem %s1, %s231
        // Predicated region
        $region37: #{tpu_custom_call.1} parent=23 // pred_check
          %p233 = pneg %p84
        $region38: #{tpu_custom_call.1} parent=23 // pred_check_branch
          %235 = sbr.rel (%p233) target = $region40
        $region39: #{tpu_custom_call.1} parent=23 // pred_region
          _
        $region40: #{tpu_custom_call.1} parent=23 // pred_fallthru
          _
      $region24: #{tpu_custom_call.1} parent=5 // pred_fallthru
        _
      %p236 = scmp.le.s32.totalorder 2, %s10
      // Predicated region
      $region41: #{tpu_custom_call.1} parent=5 // pred_check
        %p237 = pneg %p236
      $region42: #{tpu_custom_call.1} parent=5 // pred_check_branch
        %239 = sbr.rel (%p237) target = $region44
      $region43: #{tpu_custom_call.1} parent=5 // pred_region
        %s240 = ssub.s32 %s10, 2
        // Predicated region
        $region45: #{tpu_custom_call.1} parent=43 // pred_check
          %p241 = pneg %p90
        $region46: #{tpu_custom_call.1} parent=43 // pred_check_branch
          %243 = sbr.rel (%p241) target = $region48
        $region47: #{tpu_custom_call.1} parent=43 // pred_region
          %p244 = scmp.lt.s32.totalorder %s23, 4
          %s245 = scalar_select %p244, %s23, 4
          %p246 = scmp.lt.s32.totalorder %s24, 0
          %s247 = scalar_select %p246, %s24, 0
          %s248 = sadd.s32 %s247, %s245
          %s249 = smul.addr %s248, 2
          %s250 = scalar_lea.vmem %s1, %s249
        $region48: #{tpu_custom_call.1} parent=43 // pred_fallthru
          _
      $region44: #{tpu_custom_call.1} parent=5 // pred_fallthru
        _
    $region6: #{tpu_custom_call.1} parent=1 // loop_footer
      %s14 = sadd.s32 1, %s10
    $region7: #{tpu_custom_call.1} parent=1 // loop_footer_branch
      %9 = sbr.rel target = $region3
    $region8: #{tpu_custom_call.1} parent=1 // loop_exit
      _
    %251 = vsyncpa [#allocation4], 1
    %s252 = scalar_lea.sflag [#allocation4], 1
    %253 = vsyncpa %s252, 1

</llo_original>
